<compile_context>
chip_gen: v7x
topology: tpu7x:2x2x1
jax: 0.10.0
libtpu: 0.0.40
codegen_flags: <defaults>
</compile_context>

<pallas_src>
import functools

import jax
import jax.numpy as jnp
from jax.experimental import pallas as pl
from jax.experimental.pallas import tpu as pltpu


# ------------------------------- kernel ------------------------------------ #

def router_topk_kernel(x_ref, w_ref, b_ref, *out_refs, top_k, return_probs):
    """Fused: logits = x @ W + b -> softmax -> top-k -> renormalize.

    Blocks: x (tm, D_in); W (D_in, E) and b (1, E) resident (constant
    index_map).  Outputs: optional probs (tm, E) f32 and a packed (tm, 2K) f32
    tile holding [top-k weights | top-k indices-as-float].
    """
    if return_probs:
        probs_ref, packed_ref = out_refs
    else:
        (packed_ref,) = out_refs

    # Router linear on the MXU, f32 accumulation.
    logits = jnp.dot(x_ref[...], w_ref[...],
                     preferred_element_type=jnp.float32)
    logits = logits + b_ref[...].astype(jnp.float32)

    # Numerically stable softmax over the (small) expert lane axis.
    logits = logits - jnp.max(logits, axis=-1, keepdims=True)
    p = jnp.exp(logits)
    inv_sum = pl.reciprocal(jnp.sum(p, axis=-1, keepdims=True), approx=False)
    probs = p * inv_sum
    if return_probs:
        probs_ref[...] = probs.astype(probs_ref.dtype)

    E = probs.shape[-1]
    lane = jax.lax.broadcasted_iota(jnp.int32, probs.shape, 1)

    # In-kernel top-k: K static iterations of lane-max + argmax + mask.
    # Ties resolve to the lowest index (matches jax.lax.top_k).
    work = probs
    vals = []
    idxs = []
    for _ in range(top_k):
        m = jnp.max(work, axis=-1, keepdims=True)                     # (tm, 1)
        i = jnp.min(jnp.where(work == m, lane, E), axis=-1,
                    keepdims=True)                                    # (tm, 1)
        vals.append(m)
        idxs.append(i)
        work = jnp.where(lane == i, -jnp.inf, work)

    # Renormalize with a single reciprocal + K multiplies.
    denom = vals[0]
    for v in vals[1:]:
        denom = denom + v
    inv_denom = pl.reciprocal(denom, approx=False)

    # Pack weights (cols 0..K-1) and indices-as-float (cols K..2K-1) into one
    # tile so there is a single store / write-DMA per step (VPU selects only;
    # indices < E are exactly representable in f32).
    col = jax.lax.broadcasted_iota(jnp.int32, packed_ref.shape, 1)    # (tm, 2K)
    out = jnp.zeros(packed_ref.shape, jnp.float32)
    for j in range(top_k):
        wj = jnp.broadcast_to(vals[j] * inv_denom, out.shape)
        ij = jnp.broadcast_to(idxs[j].astype(jnp.float32), out.shape)
        out = jnp.where(col == j, wj, out)
        out = jnp.where(col == top_k + j, ij, out)
    packed_ref[...] = out.astype(packed_ref.dtype)


# ------------------------------- wrapper ------------------------------------ #

_LANE = 128


def _cdiv(a, b):
    return -(-a // b)


def _round_up(v, m):
    return _cdiv(v, m) * m


def noisy_topk_router_forward(x, params, top_k, *, return_probs=True, tm=None,
                              vmem_budget_bytes=40 * 1024 * 1024):
    """Forward of NoisyTopkRouter with noisy=False.

    Returns (weighted_top_k_logits, selected_experts, softmax_logits),
    matching the PyTorch module's return order.  softmax_logits is None when
    return_probs=False (MoE dispatch-only callers).
    """
    # TODO(synk): noisy=True branch (noise = randn_like(logits) * softplus(noise_linear(x)))
    # is not implemented: torch's RNG stream cannot be reproduced in Pallas.
    B, S, D_in = x.shape
    N = B * S
    flat_x = x.reshape(N, D_in)

    w = params["router_w"]   # (D_in, E)  == torch Linear weight, pre-transposed
    b = params["router_b"]   # (1, E)
    E = w.shape[1]
    out_w = 2 * top_k

    x_item = jnp.dtype(x.dtype).itemsize
    w_item = jnp.dtype(w.dtype).itemsize
    # Minimum sublane multiple for the token axis (f32: 8, bf16: 16, int8: 32).
    sub = {4: 8, 2: 16, 1: 32}[x_item]

    # --- VMEM budget, accounting for 128-lane padding of every buffer -------
    per_token = (2 * _round_up(max(D_in, _LANE), _LANE) * x_item    # x, 2 bufs
                 + 2 * _round_up(max(out_w, _LANE), _LANE) * 4)     # packed, 2 bufs
    if return_probs:
        per_token += 2 * _round_up(max(E, _LANE), _LANE) * 4        # probs, 2 bufs
    weights_bytes = (2 * _round_up(max(D_in, sub), sub)
                     * _round_up(max(E, _LANE), _LANE) * w_item     # W (resident)
                     + 2 * sub * _LANE * 4)                         # bias
    budget = max(vmem_budget_bytes - weights_bytes - (2 << 20), per_token * sub)

    if tm is None:
        tm_cap = max(sub, min(4096, budget // per_token) // sub * sub)
        # >= 2 grid steps when there is enough work so both v7x TCs get a share.
        g = max(pl.cdiv(N, tm_cap), 2 if N > sub else 1)
        tm = _round_up(pl.cdiv(N, g), sub)
    else:
        tm = max(sub, _round_up(tm, sub))

    grid_steps = pl.cdiv(N, tm)
    Np = grid_steps * tm
    if Np != N:
        flat_x = jnp.pad(flat_x, ((0, Np - N), (0, 0)))   # padded rows are dropped

    kernel = functools.partial(router_topk_kernel, top_k=top_k,
                               return_probs=return_probs)

    out_shapes = []
    out_specs = []
    if return_probs:
        out_shapes.append(jax.ShapeDtypeStruct((Np, E), jnp.float32))
        out_specs.append(pl.BlockSpec((tm, E), lambda i: (i, 0)))
    out_shapes.append(jax.ShapeDtypeStruct((Np, out_w), jnp.float32))
    out_specs.append(pl.BlockSpec((tm, out_w), lambda i: (i, 0)))

    bytes_accessed = (Np * D_in * x_item + D_in * E * w_item + E * 4
                      + Np * out_w * 4 + (Np * E * 4 if return_probs else 0))
    cost = pl.CostEstimate(flops=int(2 * Np * D_in * E),
                           transcendentals=int(Np * E),
                           bytes_accessed=int(bytes_accessed))

    results = pl.pallas_call(
        kernel,
        out_shape=tuple(out_shapes),
        grid_spec=pltpu.PrefetchScalarGridSpec(
            num_scalar_prefetch=0,
            grid=(grid_steps,),
            in_specs=[
                pl.BlockSpec((tm, D_in), lambda i: (i, 0)),
                pl.BlockSpec((D_in, E), lambda i: (0, 0)),   # resident weights
                pl.BlockSpec((1, E), lambda i: (0, 0)),      # resident bias
            ],
            out_specs=tuple(out_specs),
        ),
        compiler_params=pltpu.CompilerParams(
            dimension_semantics=("parallel",),
            vmem_limit_bytes=int(vmem_budget_bytes)),
        cost_estimate=cost,
    )(flat_x, w, b)

    if return_probs:
        probs_full, packed_full = results
        probs = probs_full[:N].reshape(B, S, E)
    else:
        (packed_full,) = results
        probs = None

    packed = packed_full[:N]
    topw = packed[:, :top_k].reshape(B, S, top_k)
    topi = packed[:, top_k:].astype(jnp.int32).reshape(B, S, top_k)
    return topw, topi, probs


# --------------------------- pure-JAX reference ----------------------------- #

def reference_forward(x, params, top_k):
    logits = x @ params["router_w"] + params["router_b"][0]
    probs = jax.nn.softmax(logits, axis=-1)
    top_vals, top_idx = jax.lax.top_k(probs, top_k)
    weighted = top_vals / jnp.sum(top_vals, axis=-1, keepdims=True)
    return weighted, top_idx, probs


# ---------------------------------- main ------------------------------------ #

if __name__ == "__main__":
    B, S = 2, 8
    n_embed, num_experts, top_k = 32, 8, 2

    key = jax.random.PRNGKey(0)
    kx, kw, kb = jax.random.split(key, 3)

    x = jax.random.normal(kx, (B, S, n_embed), dtype=jnp.float32)
    params = {
        "router_w": 0.5 * jax.random.normal(kw, (n_embed, num_experts), jnp.float32),
        "router_b": 0.1 * jax.random.normal(kb, (1, num_experts), jnp.float32),
    }

    topw, topi, probs = noisy_topk_router_forward(x, params, top_k)
    jax.block_until_ready((topw, topi, probs))

    ref_w, ref_i, ref_p = reference_forward(x, params, top_k)

    assert topw.shape == (B, S, top_k)
    assert topi.shape == (B, S, top_k)
    assert probs.shape == (B, S, num_experts)
    assert jnp.allclose(probs, ref_p, atol=1e-5, rtol=1e-5), (
        f"probs max abs err = {jnp.max(jnp.abs(probs - ref_p))}")
    assert jnp.array_equal(topi, ref_i), "top-k indices mismatch"
    assert jnp.allclose(topw, ref_w, atol=1e-5, rtol=1e-5), (
        f"weights max abs err = {jnp.max(jnp.abs(topw - ref_w))}")

    # Dispatch-only path (no softmax_logits written back to HBM).
    topw2, topi2, probs2 = noisy_topk_router_forward(x, params, top_k,
                                                     return_probs=False)
    jax.block_until_ready((topw2, topi2))
    assert probs2 is None
    assert jnp.array_equal(topi2, topi)
    assert jnp.allclose(topw2, topw, atol=1e-6, rtol=1e-6)

    # bf16-activation smoke test (halves the HBM-bound x read; compute stays f32).
    xb = x.astype(jnp.bfloat16)
    params_b = {"router_w": params["router_w"].astype(jnp.bfloat16),
                "router_b": params["router_b"]}
    tw_b, ti_b, pr_b = noisy_topk_router_forward(xb, params_b, top_k)
    jax.block_until_ready((tw_b, ti_b, pr_b))
    assert pr_b.shape == (B, S, num_experts)
    assert jnp.allclose(jnp.sum(tw_b, axis=-1), 1.0, atol=1e-3)
    assert bool(jnp.all((ti_b >= 0) & (ti_b < num_experts)))

    print("KERNEL_OK")
</pallas_src>

<mosaic_0001>
module attributes {stable_mosaic.version = 11 : i64} {
  func.func @router_topk_kernel(%arg0: i32, %arg1: memref<8x32xf32, #tpu.memory_space<vmem>>, %arg2: memref<32x8xf32, #tpu.memory_space<vmem>>, %arg3: memref<1x8xf32, #tpu.memory_space<vmem>>, %arg4: memref<8x8xf32, #tpu.memory_space<vmem>>, %arg5: memref<8x4xf32, #tpu.memory_space<vmem>>) attributes {dimension_semantics = [#tpu.dimension_semantics<parallel>], iteration_bounds = array<i64: 2>, scalar_prefetch = 0 : i64, scratch_operands = 0 : i64, tpu.core_type = #tpu.core_type<tc>, window_params = [{transform_indices = @transform_0, window_bounds = array<i64: 8, 32>}, {pipeline_mode = #tpu.pipeline_mode<synchronous>, transform_indices = @transform_1, window_bounds = array<i64: 32, 8>}, {pipeline_mode = #tpu.pipeline_mode<synchronous>, transform_indices = @transform_2, window_bounds = array<i64: 1, 8>}, {transform_indices = @transform_3, window_bounds = array<i64: 8, 8>}, {transform_indices = @transform_4, window_bounds = array<i64: 8, 4>}]} {
    %c0 = arith.constant 0 : index
    %c0_0 = arith.constant 0 : index
    %0 = vector.load %arg1[%c0, %c0_0] : memref<8x32xf32, #tpu.memory_space<vmem>>, vector<8x32xf32>
    %c0_1 = arith.constant 0 : index
    %c0_2 = arith.constant 0 : index
    %1 = vector.load %arg2[%c0_1, %c0_2] : memref<32x8xf32, #tpu.memory_space<vmem>>, vector<32x8xf32>
    %cst = arith.constant dense<0.000000e+00> : vector<8x8xf32>
    %2 = tpu.matmul %0, %1, %cst {dimension_numbers = #tpu.dot_dimension_numbers<[1], [0], [0], [1], [0, 0, 1, 1], [], []>} : vector<8x32xf32>, vector<32x8xf32>, vector<8x8xf32> -> vector<8x8xf32>
    %c0_3 = arith.constant 0 : index
    %c0_4 = arith.constant 0 : index
    %3 = vector.load %arg3[%c0_3, %c0_4] : memref<1x8xf32, #tpu.memory_space<vmem>>, vector<1x8xf32>
    %4 = vector.broadcast %3 : vector<1x8xf32> to vector<8x8xf32>
    %5 = arith.addf %2, %4 : vector<8x8xf32>
    %cst_5 = arith.constant dense<0xFF800000> : vector<8xf32>
    %6 = vector.multi_reduction <maximumf>, %5, %cst_5 [1] : vector<8x8xf32> to vector<8xf32>
    %7 = vector.shape_cast %6 : vector<8xf32> to vector<8x1xf32>
    %8 = vector.broadcast %7 : vector<8x1xf32> to vector<8x8xf32>
    %9 = arith.subf %5, %8 : vector<8x8xf32>
    %10 = math.exp %9 : vector<8x8xf32>
    %cst_6 = arith.constant dense<0.000000e+00> : vector<8xf32>
    %11 = vector.multi_reduction <add>, %10, %cst_6 [1] : vector<8x8xf32> to vector<8xf32>
    %12 = vector.shape_cast %11 : vector<8xf32> to vector<8x1xf32>
    %13 = tpu.reciprocal %12 : vector<8x1xf32> -> vector<8x1xf32>
    %14 = vector.broadcast %13 : vector<8x1xf32> to vector<8x8xf32>
    %15 = arith.mulf %10, %14 : vector<8x8xf32>
    %c0_7 = arith.constant 0 : index
    %c0_8 = arith.constant 0 : index
    %16 = vector.load %arg4[%c0_7, %c0_8] : memref<8x8xf32, #tpu.memory_space<vmem>>, vector<8x8xf32>
    tpu.vector_store %arg4[%c0_7, %c0_8], %15 {strides = array<i32>} : memref<8x8xf32, #tpu.memory_space<vmem>>, vector<8x8xf32>,
    %17 = tpu.iota {dimensions = array<i32: 1>} : vector<8x8xi32>
    %cst_9 = arith.constant dense<0xFF800000> : vector<8xf32>
    %18 = vector.multi_reduction <maximumf>, %15, %cst_9 [1] : vector<8x8xf32> to vector<8xf32>
    %19 = vector.shape_cast %18 : vector<8xf32> to vector<8x1xf32>
    %20 = vector.broadcast %19 : vector<8x1xf32> to vector<8x8xf32>
    %21 = arith.cmpf oeq, %15, %20 : vector<8x8xf32>
    %c8_i32 = arith.constant 8 : i32
    %22 = vector.broadcast %c8_i32 : i32 to vector<8x8xi32>
    %23 = arith.select %21, %17, %22 : vector<8x8xi1>, vector<8x8xi32>
    %cst_10 = arith.constant dense<2147483647> : vector<8xi32>
    %24 = vector.multi_reduction <minsi>, %23, %cst_10 [1] : vector<8x8xi32> to vector<8xi32>
    %25 = vector.shape_cast %24 : vector<8xi32> to vector<8x1xi32>
    %26 = vector.broadcast %25 : vector<8x1xi32> to vector<8x8xi32>
    %27 = arith.cmpi eq, %17, %26 : vector<8x8xi32>
    %cst_11 = arith.constant 0xFF800000 : f32
    %28 = vector.broadcast %cst_11 : f32 to vector<8x8xf32>
    %29 = arith.select %27, %28, %15 : vector<8x8xi1>, vector<8x8xf32>
    %cst_12 = arith.constant dense<0xFF800000> : vector<8xf32>
    %30 = vector.multi_reduction <maximumf>, %29, %cst_12 [1] : vector<8x8xf32> to vector<8xf32>
    %31 = vector.shape_cast %30 : vector<8xf32> to vector<8x1xf32>
    %32 = vector.broadcast %31 : vector<8x1xf32> to vector<8x8xf32>
    %33 = arith.cmpf oeq, %29, %32 : vector<8x8xf32>
    %c8_i32_13 = arith.constant 8 : i32
    %34 = vector.broadcast %c8_i32_13 : i32 to vector<8x8xi32>
    %35 = arith.select %33, %17, %34 : vector<8x8xi1>, vector<8x8xi32>
    %cst_14 = arith.constant dense<2147483647> : vector<8xi32>
    %36 = vector.multi_reduction <minsi>, %35, %cst_14 [1] : vector<8x8xi32> to vector<8xi32>
    %37 = vector.shape_cast %36 : vector<8xi32> to vector<8x1xi32>
    %38 = arith.addf %19, %31 : vector<8x1xf32>
    %39 = tpu.reciprocal %38 : vector<8x1xf32> -> vector<8x1xf32>
    %40 = tpu.iota {dimensions = array<i32: 1>} : vector<8x4xi32>
    %cst_15 = arith.constant 0.000000e+00 : f32
    %41 = vector.broadcast %cst_15 : f32 to vector<8x4xf32>
    %42 = arith.mulf %19, %39 : vector<8x1xf32>
    %43 = vector.shape_cast %42 : vector<8x1xf32> to vector<8x1xf32>
    %44 = vector.broadcast %43 : vector<8x1xf32> to vector<8x4xf32>
    %45 = arith.sitofp %25 : vector<8x1xi32> to vector<8x1xf32>
    %46 = vector.shape_cast %45 : vector<8x1xf32> to vector<8x1xf32>
    %47 = vector.broadcast %46 : vector<8x1xf32> to vector<8x4xf32>
    %c0_i32 = arith.constant 0 : i32
    %48 = vector.broadcast %c0_i32 : i32 to vector<8x4xi32>
    %49 = arith.cmpi eq, %40, %48 : vector<8x4xi32>
    %50 = arith.select %49, %44, %41 : vector<8x4xi1>, vector<8x4xf32>
    %c2_i32 = arith.constant 2 : i32
    %51 = vector.broadcast %c2_i32 : i32 to vector<8x4xi32>
    %52 = arith.cmpi eq, %40, %51 : vector<8x4xi32>
    %53 = arith.select %52, %47, %50 : vector<8x4xi1>, vector<8x4xf32>
    %54 = arith.mulf %31, %39 : vector<8x1xf32>
    %55 = vector.shape_cast %54 : vector<8x1xf32> to vector<8x1xf32>
    %56 = vector.broadcast %55 : vector<8x1xf32> to vector<8x4xf32>
    %57 = arith.sitofp %37 : vector<8x1xi32> to vector<8x1xf32>
    %58 = vector.shape_cast %57 : vector<8x1xf32> to vector<8x1xf32>
    %59 = vector.broadcast %58 : vector<8x1xf32> to vector<8x4xf32>
    %c1_i32 = arith.constant 1 : i32
    %60 = vector.broadcast %c1_i32 : i32 to vector<8x4xi32>
    %61 = arith.cmpi eq, %40, %60 : vector<8x4xi32>
    %62 = arith.select %61, %56, %53 : vector<8x4xi1>, vector<8x4xf32>
    %c3_i32 = arith.constant 3 : i32
    %63 = vector.broadcast %c3_i32 : i32 to vector<8x4xi32>
    %64 = arith.cmpi eq, %40, %63 : vector<8x4xi32>
    %65 = arith.select %64, %59, %62 : vector<8x4xi1>, vector<8x4xf32>
    %c0_16 = arith.constant 0 : index
    %c0_17 = arith.constant 0 : index
    %66 = vector.load %arg5[%c0_16, %c0_17] : memref<8x4xf32, #tpu.memory_space<vmem>>, vector<8x4xf32>
    tpu.vector_store %arg5[%c0_16, %c0_17], %65 {strides = array<i32>} : memref<8x4xf32, #tpu.memory_space<vmem>>, vector<8x4xf32>,
    return
  }
  func.func @transform_0(%arg0: i32) -> (i32, i32) {
    %c0_i32 = arith.constant 0 : i32
    %c0_i32_0 = arith.constant 0 : i32
    return %arg0, %c0_i32 : i32, i32
  }
  func.func @transform_1(%arg0: i32) -> (i32, i32) {
    %c0_i32 = arith.constant 0 : i32
    %c0_i32_0 = arith.constant 0 : i32
    %c0_i32_1 = arith.constant 0 : i32
    return %c0_i32, %c0_i32_0 : i32, i32
  }
  func.func @transform_2(%arg0: i32) -> (i32, i32) {
    %c0_i32 = arith.constant 0 : i32
    %c0_i32_0 = arith.constant 0 : i32
    %c0_i32_1 = arith.constant 0 : i32
    return %c0_i32, %c0_i32_0 : i32, i32
  }
  func.func @transform_3(%arg0: i32) -> (i32, i32) {
    %c0_i32 = arith.constant 0 : i32
    %c0_i32_0 = arith.constant 0 : i32
    return %arg0, %c0_i32 : i32, i32
  }
  func.func @transform_4(%arg0: i32) -> (i32, i32) {
    %c0_i32 = arith.constant 0 : i32
    %c0_i32_0 = arith.constant 0 : i32
    return %arg0, %c0_i32 : i32, i32
  }
}

</mosaic_0001>

<llo_original>
// kernel: tpu_custom_call.1
$region0: #{tpu_custom_call.1}
  #allocation0 [shape = 'u32[]', space=smem, size = 0x4, offset = 0x4, fixed_abs, tag = 'smem constant byte address 0x4 - core index']
  #allocation1 [shape = 'u32[144,128]{1,0:T(1,128)}', space=vmem, size = 0x12000, scoped, tag = 'internal scratch']
  %s0 = inlined_call_operand.vmem [shape: f32[16,32], index: 0, kind: input, shape index: {}]
  %s1 = inlined_call_operand.vmem [shape: f32[32,8], index: 1, kind: input, shape index: {}]
  %s2 = inlined_call_operand.vmem [shape: f32[1,8], index: 2, kind: input, shape index: {}]
  %s3 = inlined_call_operand.vmem [shape: f32[16,8], index: 3, kind: output, shape index: {0}]
  %s4 = inlined_call_operand.vmem [shape: f32[16,4], index: 4, kind: output, shape index: {1}]
  %5 = xla_tuple %s3, %s4
  %s6 = sld [smem:[#allocation0]]
  $region53: #{tpu_custom_call.1} parent=0
    _
  %s8 = ssub.s32 1, %s6
  %s9 = scalar_select 0, %s8, %s6
  loop: start=0, step=1, limit=4
  $region2: #{tpu_custom_call.1} parent=0 // loop_pre_header
    _
  $region3: #{tpu_custom_call.1} parent=0 // loop_header
    %s11 = sphi 0, %s15
    %p12 = scmp.ge.s32.totalorder %s11, 4
    %s21 = sphi 0, %s23
    %s24 = sphi 0, %s21
    %s25 = sphi 0, %s24
    %s41 = sphi 0, %s25
    %s45 = sphi 0, %s45
    %s47 = sphi 0, %s45
    %s48 = sphi 0, %s47
    %s62 = sphi 0, %s48
    %s66 = sphi 0, %s66
    %s68 = sphi 0, %s66
    %s69 = sphi 0, %s68
    %s83 = sphi 0, %s69
    %s89 = sphi 0, %s91
    %s92 = sphi 0, %s89
    %s93 = sphi 0, %s92
    %s109 = sphi 0, %s93
    %s115 = sphi 0, %s117
    %s118 = sphi 0, %s115
    %s119 = sphi 0, %s118
    %s135 = sphi 0, %s119
  $region4: #{tpu_custom_call.1} parent=0 // loop_header_branch
    %14 = sbr.rel (%p12) target = $region8
  $region5: #{tpu_custom_call.1} parent=0 // loop_body
    %s16 = ssub.s32 %s11, 1
    %s17 = ssub.s32 %s11, 2
    %s18 = sadd.s32 %s11, 1
    %s19 = ssub.s32 %s11, %s18
    %p20 = scmp.eq.s32.totalorder %s19, 0
    %s22 = sadd.s32 %s21, 1
    %s23 = scalar_select %p20, %s21, %s22
    %p26 = pneg %p20
    %p27 = scmp.eq.s32.totalorder %s11, 1
    %p28 = por %p26, %p27
    %p29 = scmp.ne.s32.totalorder %s21, %s24
    %p30 = scmp.eq.s32.totalorder %s11, 0
    %p31 = por %p29, %p30
    %p32 = scmp.ne.s32.totalorder %s21, %s24
    %p33 = scmp.eq.s32.totalorder %s16, 1
    %p34 = por %p32, %p33
    %p35 = scmp.ne.s32.totalorder %s24, %s25
    %p36 = scmp.eq.s32.totalorder %s16, 0
    %p37 = por %p35, %p36
    %p38 = scmp.ne.s32.totalorder %s24, %s25
    %p39 = scmp.eq.s32.totalorder %s17, 1
    %p40 = por %p38, %p39
    %p42 = scmp.ne.s32.totalorder %s25, %s41
    %p43 = scmp.eq.s32.totalorder %s17, 0
    %p44 = por %p42, %p43
    %s46 = sadd.s32 %s45, 1
    %p49 = scmp.eq.s32.totalorder %s11, 1
    %p50 = scmp.ne.s32.totalorder %s45, %s47
    %p51 = scmp.eq.s32.totalorder %s11, 0
    %p52 = por %p50, %p51
    %p53 = scmp.ne.s32.totalorder %s45, %s47
    %p54 = scmp.eq.s32.totalorder %s16, 1
    %p55 = por %p53, %p54
    %p56 = scmp.ne.s32.totalorder %s47, %s48
    %p57 = scmp.eq.s32.totalorder %s16, 0
    %p58 = por %p56, %p57
    %p59 = scmp.ne.s32.totalorder %s47, %s48
    %p60 = scmp.eq.s32.totalorder %s17, 1
    %p61 = por %p59, %p60
    %p63 = scmp.ne.s32.totalorder %s48, %s62
    %p64 = scmp.eq.s32.totalorder %s17, 0
    %p65 = por %p63, %p64
    %s67 = sadd.s32 %s66, 1
    %p70 = scmp.eq.s32.totalorder %s11, 1
    %p71 = scmp.ne.s32.totalorder %s66, %s68
    %p72 = scmp.eq.s32.totalorder %s11, 0
    %p73 = por %p71, %p72
    %p74 = scmp.ne.s32.totalorder %s66, %s68
    %p75 = scmp.eq.s32.totalorder %s16, 1
    %p76 = por %p74, %p75
    %p77 = scmp.ne.s32.totalorder %s68, %s69
    %p78 = scmp.eq.s32.totalorder %s16, 0
    %p79 = por %p77, %p78
    %p80 = scmp.ne.s32.totalorder %s68, %s69
    %p81 = scmp.eq.s32.totalorder %s17, 1
    %p82 = por %p80, %p81
    %p84 = scmp.ne.s32.totalorder %s69, %s83
    %p85 = scmp.eq.s32.totalorder %s17, 0
    %p86 = por %p84, %p85
    %s87 = ssub.s32 %s11, %s18
    %p88 = scmp.eq.s32.totalorder %s87, 0
    %s90 = sadd.s32 %s89, 1
    %s91 = scalar_select %p88, %s89, %s90
    %p94 = pneg %p88
    %p95 = scmp.eq.s32.totalorder %s11, 1
    %p96 = por %p94, %p95
    %p97 = scmp.ne.s32.totalorder %s89, %s92
    %p98 = scmp.eq.s32.totalorder %s11, 0
    %p99 = por %p97, %p98
    %p100 = scmp.ne.s32.totalorder %s89, %s92
    %p101 = scmp.eq.s32.totalorder %s16, 1
    %p102 = por %p100, %p101
    %p103 = scmp.ne.s32.totalorder %s92, %s93
    %p104 = scmp.eq.s32.totalorder %s16, 0
    %p105 = por %p103, %p104
    %p106 = scmp.ne.s32.totalorder %s92, %s93
    %p107 = scmp.eq.s32.totalorder %s17, 1
    %p108 = por %p106, %p107
    %p110 = scmp.ne.s32.totalorder %s93, %s109
    %p111 = scmp.eq.s32.totalorder %s17, 0
    %p112 = por %p110, %p111
    %s113 = ssub.s32 %s11, %s18
    %p114 = scmp.eq.s32.totalorder %s113, 0
    %s116 = sadd.s32 %s115, 1
    %s117 = scalar_select %p114, %s115, %s116
    %p120 = pneg %p114
    %p121 = scmp.eq.s32.totalorder %s11, 1
    %p122 = por %p120, %p121
    %p123 = scmp.ne.s32.totalorder %s115, %s118
    %p124 = scmp.eq.s32.totalorder %s11, 0
    %p125 = por %p123, %p124
    %p126 = scmp.ne.s32.totalorder %s115, %s118
    %p127 = scmp.eq.s32.totalorder %s16, 1
    %p128 = por %p126, %p127
    %p129 = scmp.ne.s32.totalorder %s118, %s119
    %p130 = scmp.eq.s32.totalorder %s16, 0
    %p131 = por %p129, %p130
    %p132 = scmp.ne.s32.totalorder %s118, %s119
    %p133 = scmp.eq.s32.totalorder %s17, 1
    %p134 = por %p132, %p133
    %p136 = scmp.ne.s32.totalorder %s119, %s135
    %p137 = scmp.eq.s32.totalorder %s17, 0
    %p138 = por %p136, %p137
    %p139 = scmp.le.s32.totalorder 1, %s11
    %p140 = scmp.lt.s32.totalorder %s11, 3
    %p141 = pnand %p139, %p140
    %p142 = pneg %p141
    // Predicated region
    $region9: #{tpu_custom_call.1} parent=5 // pred_check
      _
    $region10: #{tpu_custom_call.1} parent=5 // pred_check_branch
      %144 = sbr.rel (%p141) target = $region12
    $region11: #{tpu_custom_call.1} parent=5 // pred_region
      %s145 = ssub.s32 %s11, 1
      // Predicated region
      $region13: #{tpu_custom_call.1} parent=11 // pred_check
        %p146 = pneg %p58
      $region14: #{tpu_custom_call.1} parent=11 // pred_check_branch
        %148 = sbr.rel (%p146) target = $region16
      $region15: #{tpu_custom_call.1} parent=11 // pred_region
        _
      $region16: #{tpu_custom_call.1} parent=11 // pred_fallthru
        _
      // Predicated region
      $region17: #{tpu_custom_call.1} parent=11 // pred_check
        %p149 = pneg %p79
      $region18: #{tpu_custom_call.1} parent=11 // pred_check_branch
        %151 = sbr.rel (%p149) target = $region20
      $region19: #{tpu_custom_call.1} parent=11 // pred_region
        _
      $region20: #{tpu_custom_call.1} parent=11 // pred_fallthru
        _
    $region12: #{tpu_custom_call.1} parent=5 // pred_fallthru
      _
    %p152 = scmp.lt.s32.totalorder %s11, 2
    // Predicated region
    $region21: #{tpu_custom_call.1} parent=5 // pred_check
      %p153 = pneg %p152
    $region22: #{tpu_custom_call.1} parent=5 // pred_check_branch
      %155 = sbr.rel (%p153) target = $region24
    $region23: #{tpu_custom_call.1} parent=5 // pred_region
      // Predicated region
      $region25: #{tpu_custom_call.1} parent=23 // pred_check
        %p156 = pneg %p31
      $region26: #{tpu_custom_call.1} parent=23 // pred_check_branch
        %158 = sbr.rel (%p156) target = $region28
      $region27: #{tpu_custom_call.1} parent=23 // pred_region
        %p159 = scmp.lt.s32.totalorder %s11, 1
        %s160 = scalar_select %p159, %s11, 1
        %s161 = smul.addr %s160, 8
        %s162 = scalar_lea.vmem %s0, %s161
      $region28: #{tpu_custom_call.1} parent=23 // pred_fallthru
        _
    $region24: #{tpu_custom_call.1} parent=5 // pred_fallthru
      _
    %p163 = scmp.le.s32.totalorder 1, %s11
    %p164 = scmp.lt.s32.totalorder %s11, 3
    %p165 = pnand %p163, %p164
    %p166 = pneg %p165
    // Predicated region
    $region29: #{tpu_custom_call.1} parent=5 // pred_check
      _
    $region30: #{tpu_custom_call.1} parent=5 // pred_check_branch
      %168 = sbr.rel (%p165) target = $region32
    $region31: #{tpu_custom_call.1} parent=5 // pred_region
      %s169 = ssub.s32 %s11, 1
      %p170 = scmp.lt.s32.totalorder %s16, 1
      %s171 = scalar_select %p170, %s16, 1
      %s172 = smul.addr %s171, 8
      %s173 = scalar_lea.vmem %s0, %s172
      %p174 = pneg %p37
      %p175 = pneg %p34
      %p176 = pneg %p58
      %p177 = pneg %p55
      %p178 = pneg %p79
      %p179 = pneg %p76
      %p180 = pneg %p105
      %p181 = pneg %p102
      %p182 = scmp.lt.s32.totalorder %s16, 1
      %s183 = scalar_select %p182, %s16, 1
      %s184 = smul.addr %s183, 8
      %s185 = scalar_lea.vmem %s3, %s184
      %p186 = pneg %p131
      %p187 = pneg %p128
      %p188 = scmp.lt.s32.totalorder %s16, 1
      %s189 = scalar_select %p188, %s16, 1
      %s190 = smul.addr %s189, 8
      %s191 = scalar_lea.vmem %s4, %s190
      %p192 = scmp.lt.s32.totalorder %s16, 1
      %s193 = scalar_select %p192, %s16, 1
      %s194 = smul.addr %s193, 8
      %s195 = scalar_lea.vmem %s0, %s194
      %p196 = scmp.lt.s32.totalorder %s16, 1
      %s197 = scalar_select %p196, %s16, 1
      %s198 = smul.addr %s197, 8
      %s199 = scalar_lea.vmem %s3, %s198
      %p200 = scmp.lt.s32.totalorder %s16, 1
      %s201 = scalar_select %p200, %s16, 1
      %s202 = smul.addr %s201, 8
      %s203 = scalar_lea.vmem %s4, %s202
      %v204 = vld [vmem:[%s195] sm:$0xff]
      %v205 = vld [vmem:[%s1] sm:$0xff]
      %v206 = vld [vmem:[%s1 + $0x8] sm:$0xff]
      %v207 = vld [vmem:[%s1 + $0x10] sm:$0xff]
      %v208 = vld [vmem:[%s1 + $0x18] sm:$0xff]
      %v209 = vld [vmem:[%s2] sm:$0x1]
      %v211 = vlaneseq
      %v212 = vshrl.u32 %v211, 7
      %v213 = vsub.s32 0, %v212
      %v214 = vrot.slane %v209, %v213
      %vm216 = vcmask 261120
      %v218 = vsel %vm216, %v204, 0
      %220 = vmatprep.subr.mxu0 0.0
      %221 = vmatpush1.msra.mxu0 %v205
      %222 = vmatprep.subr.mxu0 0.0
      %223 = vmatpush1.msra.mxu0 %v206
      %224 = vmatprep.subr.mxu0 0.0
      %225 = vmatpush1.msra.mxu0 %v207
      %226 = vmatprep.subr.mxu0 0.0
      %227 = vmatpush1.msra.mxu0 %v208
      %228 = vmatprep.subr.mxu0 0.0
      %229 = vmatpush1.msra.mxu0 0.0
      %230 = vmatprep.subr.mxu0 0.0
      %231 = vmatpush1.msra.mxu0 0.0
      %232 = vmatprep.subr.mxu0 0.0
      %233 = vmatpush1.msra.mxu0 0.0
      %234 = vmatprep.subr.mxu0 0.0
      %235 = vmatpush1.msra.mxu0 0.0
      %236 = vmatprep.subr.mxu0 0.0
      %237 = vmatpush1.msra.mxu0 0.0
      %238 = vmatprep.subr.mxu0 0.0
      %239 = vmatpush1.msra.mxu0 0.0
      %240 = vmatprep.subr.mxu0 0.0
      %241 = vmatpush1.msra.mxu0 0.0
      %242 = vmatprep.subr.mxu0 0.0
      %243 = vmatpush1.msra.mxu0 0.0
      %244 = vmatprep.subr.mxu0 0.0
      %245 = vmatpush1.msra.mxu0 0.0
      %246 = vmatprep.subr.mxu0 0.0
      %247 = vmatpush1.msra.mxu0 0.0
      %248 = vmatprep.subr.mxu0 0.0
      %249 = vmatpush1.msra.mxu0 0.0
      %250 = vmatprep.subr.mxu0 0.0
      %251 = vmatpush1.msra.mxu0 0.0
      %252 = vmatprep.subr.mxu0 0.0
      %253 = vmatpush1.msra.mxu0 0.0
      %254 = vmatprep.subr.mxu0 0.0
      %255 = vmatpush1.msra.mxu0 0.0
      %256 = vmatprep.subr.mxu0 0.0
      %257 = vmatpush1.msra.mxu0 0.0
      %258 = vmatprep.subr.mxu0 0.0
      %259 = vmatpush1.msra.mxu0 0.0
      %260 = vmatprep.subr.mxu0 0.0
      %261 = vmatpush1.msra.mxu0 0.0
      %262 = vmatprep.subr.mxu0 0.0
      %263 = vmatpush1.msra.mxu0 0.0
      %264 = vmatprep.subr.mxu0 0.0
      %265 = vmatpush1.msra.mxu0 0.0
      %266 = vmatprep.subr.mxu0 0.0
      %267 = vmatpush1.msra.mxu0 0.0
      %268 = vmatprep.subr.mxu0 0.0
      %269 = vmatpush1.msra.mxu0 0.0
      %270 = vmatprep.subr.mxu0 0.0
      %271 = vmatpush1.msra.mxu0 0.0
      %272 = vmatprep.subr.mxu0 0.0
      %273 = vmatpush1.msra.mxu0 0.0
      %274 = vmatprep.subr.mxu0 0.0
      %275 = vmatpush1.msra.mxu0 0.0
      %276 = vmatprep.subr.mxu0 0.0
      %277 = vmatpush1.msra.mxu0 0.0
      %278 = vmatprep.subr.mxu0 0.0
      %279 = vmatpush1.msra.mxu0 0.0
      %280 = vmatprep.subr.mxu0 0.0
      %281 = vmatpush1.msra.mxu0 0.0
      %282 = vmatprep.subr.mxu0 0.0
      %283 = vmatpush1.msra.mxu0 0.0
      %284 = vmatprep.mubr.f32.mxu0 0.0
      %285 = vmatmul.mubr.f32.gmra.mrb[0].mxu0 %v218
      %v286 = vpop.f32.mrb[0].mxu0
      %v287 = vadd.f32 %v214, %v286
      %v288 = vpop.f32.mrb[0].mxu0
      %289 = vdwg.mxu0
      %vm290 = vcmask 64512
      %v291 = vsel %vm290, %v287, -inf
      %292 = vmax.xlane.f32.xlu0 %v291
      %v293 = vpop.xlane.xlu0 %292
      %v294 = vsub.f32 %v287, %v293
      %v295 = vmul.f32 %v294, 1.442695
      %v296 = vpow.pop %v295
      %v297 = vsel %vm290, %v296, 0.0
      %298 = vadd.xlane.f32.xlu0 %v297
      %v299 = vpop.xlane.xlu0 %298
      %v300 = vrcp.pop %v299
      %v301 = vmul.f32 %v296, %v300
      %302 = vst.msk [vmem:[%s199] sm:$0xff] %vm290, %v301
      %v303 = vlaneseq
      %v304 = vand.u32 %v303, 127
      %v305 = vsel %vm290, %v301, -inf
      %306 = vmax.xlane.f32.xlu0 %v305
      %v307 = vpop.xlane.xlu0 %306
      %vm308 = vcmp.eq.f32.partialorder %v301, %v307
      %v309 = vsel %vm308, %v304, 8
      %v310 = vsel %vm290, %v309, 2147483647
      %v311 = vand.u32 %v310, 65535
      %v312 = vshra.s32 %v310, 16
      %v313 = vcvt.s32.f32 %v311
      %v314 = vcvt.s32.f32 %v312
      %315 = vmin.xlane.f32.xlu0 %v314
      %v316 = vpop.xlane.xlu0 %315
      %vm317 = vcmp.eq.f32.partialorder %v314, %v316
      %v318 = vsel %vm317, %v313, inf
      %319 = vmin.xlane.f32.xlu0 %v318
      %v320 = vpop.xlane.xlu0 %319
      %v321 = vcvt.f32.s32 %v320
      %v322 = vcvt.f32.s32 %v316
      %v323 = vshll.u32 %v322, 16
      %v324 = vadd.s32 %v323, %v321
      %vm325 = vcmp.eq.s32.totalorder %v304, %v324
      %v326 = vsel %vm325, -inf, %v301
      %v327 = vsel %vm290, %v326, -inf
      %328 = vmax.xlane.f32.xlu0 %v327
      %v329 = vpop.xlane.xlu0 %328
      %vm330 = vcmp.eq.f32.partialorder %v326, %v329
      %v331 = vsel %vm330, %v304, 8
      %v332 = vsel %vm290, %v331, 2147483647
      %v333 = vand.u32 %v332, 65535
      %v334 = vshra.s32 %v332, 16
      %v335 = vcvt.s32.f32 %v333
      %v336 = vcvt.s32.f32 %v334
      %337 = vmin.xlane.f32.xlu0 %v336
      %v338 = vpop.xlane.xlu0 %337
      %vm339 = vcmp.eq.f32.partialorder %v336, %v338
      %v340 = vsel %vm339, %v335, inf
      %341 = vmin.xlane.f32.xlu0 %v340
      %v342 = vpop.xlane.xlu0 %341
      %v343 = vcvt.f32.s32 %v342
      %v344 = vcvt.f32.s32 %v338
      %v345 = vshll.u32 %v344, 16
      %v346 = vadd.s32 %v345, %v343
      %v347 = vadd.f32 %v307, %v329
      %v348 = vrcp.pop %v347
      %v349 = vmul.f32 %v307, %v348
      %v350 = vcvt.s32.f32 %v324
      %vm351 = vcmp.eq.s32.totalorder %v304, 0
      %v352 = vsel %vm351, %v349, 0.0
      %vm353 = vcmp.eq.s32.totalorder %v304, 2
      %v354 = vsel %vm353, %v350, %v352
      %v355 = vmul.f32 %v329, %v348
      %v356 = vcvt.s32.f32 %v346
      %vm357 = vcmp.eq.s32.totalorder %v304, 1
      %v358 = vsel %vm357, %v355, %v354
      %vm359 = vcmp.eq.s32.totalorder %v304, 3
      %v360 = vsel %vm359, %v356, %v358
      %vm361 = vcmask 31744
      %362 = vst.msk [vmem:[%s203] sm:$0xff] %vm361, %v360
      %p363 = scmp.lt.s32.totalorder %s16, 1
      %s364 = scalar_select %p363, %s16, 1
      %s365 = smul.addr %s364, 8
      %s366 = scalar_lea.vmem %s3, %s365
      %p367 = scmp.lt.s32.totalorder %s16, 1
      %s368 = scalar_select %p367, %s16, 1
      %s369 = smul.addr %s368, 8
      %s370 = scalar_lea.vmem %s4, %s369
      // Predicated region
      $region33: #{tpu_custom_call.1} parent=31 // pred_check
        %p371 = pneg %p102
      $region34: #{tpu_custom_call.1} parent=31 // pred_check_branch
        %373 = sbr.rel (%p371) target = $region36
      $region35: #{tpu_custom_call.1} parent=31 // pred_region
        _
      $region36: #{tpu_custom_call.1} parent=31 // pred_fallthru
        _
      // Predicated region
      $region37: #{tpu_custom_call.1} parent=31 // pred_check
        %p374 = pneg %p128
      $region38: #{tpu_custom_call.1} parent=31 // pred_check_branch
        %376 = sbr.rel (%p374) target = $region40
      $region39: #{tpu_custom_call.1} parent=31 // pred_region
        _
      $region40: #{tpu_custom_call.1} parent=31 // pred_fallthru
        _
    $region32: #{tpu_custom_call.1} parent=5 // pred_fallthru
      _
    %p377 = scmp.le.s32.totalorder 2, %s11
    // Predicated region
    $region41: #{tpu_custom_call.1} parent=5 // pred_check
      %p378 = pneg %p377
    $region42: #{tpu_custom_call.1} parent=5 // pred_check_branch
      %380 = sbr.rel (%p378) target = $region44
    $region43: #{tpu_custom_call.1} parent=5 // pred_region
      %s381 = ssub.s32 %s11, 2
      // Predicated region
      $region45: #{tpu_custom_call.1} parent=43 // pred_check
        %p382 = pneg %p108
      $region46: #{tpu_custom_call.1} parent=43 // pred_check_branch
        %384 = sbr.rel (%p382) target = $region48
      $region47: #{tpu_custom_call.1} parent=43 // pred_region
        %p385 = scmp.lt.s32.totalorder %s17, 1
        %s386 = scalar_select %p385, %s17, 1
        %s387 = smul.addr %s386, 8
        %s388 = scalar_lea.vmem %s3, %s387
      $region48: #{tpu_custom_call.1} parent=43 // pred_fallthru
        _
      // Predicated region
      $region49: #{tpu_custom_call.1} parent=43 // pred_check
        %p389 = pneg %p134
      $region50: #{tpu_custom_call.1} parent=43 // pred_check_branch
        %391 = sbr.rel (%p389) target = $region52
      $region51: #{tpu_custom_call.1} parent=43 // pred_region
        %p392 = scmp.lt.s32.totalorder %s17, 1
        %s393 = scalar_select %p392, %s17, 1
        %s394 = smul.addr %s393, 8
        %s395 = scalar_lea.vmem %s4, %s394
      $region52: #{tpu_custom_call.1} parent=43 // pred_fallthru
        _
    $region44: #{tpu_custom_call.1} parent=5 // pred_fallthru
      _
  $region6: #{tpu_custom_call.1} parent=0 // loop_footer
    %s15 = sadd.s32 1, %s11
  $region7: #{tpu_custom_call.1} parent=0 // loop_footer_branch
    %10 = sbr.rel target = $region3
  $region8: #{tpu_custom_call.1} parent=0 // loop_exit
    _

</llo_original>
